<compile_context>
chip_gen: v7x
topology: tpu7x:2x2x1
jax: 0.10.0
libtpu: 0.0.40
codegen_flags: <defaults>
</compile_context>

<pallas_src>
import jax
import jax.numpy as jnp
import numpy as np
from jax.experimental import pallas as pl
from jax.experimental.pallas import tpu as pltpu

INPUT_SIZE = 4
WIDTH = 128
DEPTH = 4  # -> DEPTH - 2 = 2 hidden (WIDTH x WIDTH) layers


def mlp_kernel(x_ref, w1_ref, b1_ref, w2_ref, b2_ref, w3_ref, b3_ref,
               w4_ref, b4_ref, o_ref):
    # Feature-major: x is (4, tb), activations are (128, tb), batch on lanes.
    x = x_ref[...]        # (4, tb)   f32
    w1 = w1_ref[...]      # (128, 4)  f32

    # layer 1 (K=4): rank-4 update on the VPU (lane-broadcast weight column x
    # sublane-broadcast input row), exact f32 -- no near-empty MXU pass.
    h = w1[:, 0:1] * x[0:1, :]
    for k in range(1, INPUT_SIZE):
        h = h + w1[:, k:k + 1] * x[k:k + 1, :]
    h = jnp.maximum(h + b1_ref[...], 0.0)              # (128, tb) f32

    # hidden layer 2: bf16 x bf16 -> f32 accumulate on the MXU.
    h = jnp.dot(w2_ref[...], h.astype(jnp.bfloat16),
                preferred_element_type=jnp.float32)
    h = jnp.maximum(h + b2_ref[...], 0.0)

    # hidden layer 3: bf16 x bf16 -> f32 accumulate on the MXU.
    h = jnp.dot(w3_ref[...], h.astype(jnp.bfloat16),
                preferred_element_type=jnp.float32)
    h = jnp.maximum(h + b3_ref[...], 0.0)

    # output layer (128 -> 1): VPU multiply + sublane reduction against the
    # (128, 1) weight column; result is already a lane-dense (1, tb) row, so
    # no relayout/transpose is needed before the store.
    out = jnp.sum(h * w4_ref[...], axis=0, keepdims=True) + b4_ref[...]
    o_ref[...] = out.astype(o_ref.dtype)


def _round_up(n, m):
    return ((n + m - 1) // m) * m


def mlp_forward(x, params, *, tile_b=None):
    """x: (B, INPUT_SIZE) f32.
    params: PyTorch-layout weights `w{i}` of shape (out, in), biases `b{i}` of
    shape (out,)."""
    B, F = x.shape
    assert F == INPUT_SIZE

    if tile_b is None:
        if B >= 1024:
            # Big 128-aligned tiles (sweep 1024-4096 per chip) to amortize the
            # ~0.35us/step pipeline overhead, but keep >= 2 grid steps so both
            # v7x TensorCores get work via the "parallel" grid axis.
            tile_b = min(2048, _round_up((B + 1) // 2, 128))
        else:
            # Tiny batches (like the demo): one 128-aligned tile, single step.
            tile_b = _round_up(B, 128)
    tile_b = max(128, _round_up(tile_b, 128))

    num_tiles = pl.cdiv(B, tile_b)
    b_pad = num_tiles * tile_b

    # Feature-major input: (INPUT_SIZE, b_pad); the transpose is B*16 bytes.
    # Padded batch columns are computed with real biases and sliced off below;
    # any future in-kernel reduction over the batch must re-mask them.
    xt = x.T
    if b_pad != B:
        xt = jnp.pad(xt, ((0, 0), (0, b_pad - B)))

    w1 = params["w1"]                                   # (128, 4) f32
    b1 = params["b1"].reshape(WIDTH, 1)
    w2 = params["w2"].astype(jnp.bfloat16)              # cast once -> halves DMA
    b2 = params["b2"].reshape(WIDTH, 1)
    w3 = params["w3"].astype(jnp.bfloat16)
    b3 = params["b3"].reshape(WIDTH, 1)
    w4 = params["w4"].reshape(WIDTH, 1)                 # (1,128) -> (128,1) column
    b4 = params["b4"].reshape(1, 1)

    full = lambda arr: pl.BlockSpec(arr.shape, lambda i: (0, 0))

    out_row = pl.pallas_call(
        mlp_kernel,
        out_shape=jax.ShapeDtypeStruct((1, b_pad), jnp.float32),
        grid_spec=pltpu.PrefetchScalarGridSpec(
            num_scalar_prefetch=0,
            grid=(num_tiles,),
            in_specs=[
                pl.BlockSpec((INPUT_SIZE, tile_b), lambda i: (0, i)),  # x tile
                full(w1), full(b1),
                full(w2), full(b2),
                full(w3), full(b3),
                full(w4), full(b4),
            ],
            # lane-dense (1, tile_b) output row per grid step
            out_specs=pl.BlockSpec((1, tile_b), lambda i: (0, i)),
        ),
        compiler_params=pltpu.CompilerParams(
            dimension_semantics=("parallel",)),
    )(xt, w1, b1, w2, b2, w3, b3, w4, b4)

    return out_row.reshape(b_pad, 1)[:B]


def init_params(key):
    """Deterministic init mimicking nn.Linear: weight (out, in), bias (out,),
    both U(-1/sqrt(fan_in), 1/sqrt(fan_in))."""
    dims = [(INPUT_SIZE, WIDTH), (WIDTH, WIDTH), (WIDTH, WIDTH), (WIDTH, 1)]
    params = {}
    for idx, (fan_in, fan_out) in enumerate(dims, start=1):
        key, kw, kb = jax.random.split(key, 3)
        bound = 1.0 / np.sqrt(fan_in)
        params[f"w{idx}"] = jax.random.uniform(
            kw, (fan_out, fan_in), jnp.float32, -bound, bound)
        params[f"b{idx}"] = jax.random.uniform(
            kb, (fan_out,), jnp.float32, -bound, bound)
    return params


def mlp_reference(x, p):
    h = jnp.maximum(x @ p["w1"].T + p["b1"], 0.0)
    h = jnp.maximum(h @ p["w2"].T + p["b2"], 0.0)
    h = jnp.maximum(h @ p["w3"].T + p["b3"], 0.0)
    return h @ p["w4"].T + p["b4"]


if __name__ == "__main__":
    key = jax.random.PRNGKey(0)
    key, kx = jax.random.split(key)
    batch = 32
    x = jax.random.normal(kx, (batch, INPUT_SIZE), jnp.float32)

    params = init_params(key)

    out = mlp_forward(x, params)          # small batch -> single grid step
    out = jax.block_until_ready(out)

    ref = mlp_reference(x, params)        # pure-f32 reference
    assert out.shape == (batch, 1)
    # bf16 hidden-layer matmuls (f32 accumulation) -> loosened tolerance
    np.testing.assert_allclose(np.asarray(out), np.asarray(ref),
                               rtol=2e-2, atol=1e-2)
    print("KERNEL_OK")
</pallas_src>

<mosaic_0001>
module attributes {stable_mosaic.version = 11 : i64} {
  func.func @mlp_kernel(%arg0: i32, %arg1: memref<4x128xf32, #tpu.memory_space<vmem>>, %arg2: memref<128x4xf32, #tpu.memory_space<vmem>>, %arg3: memref<128x1xf32, #tpu.memory_space<vmem>>, %arg4: memref<128x128xbf16, #tpu.memory_space<vmem>>, %arg5: memref<128x1xf32, #tpu.memory_space<vmem>>, %arg6: memref<128x128xbf16, #tpu.memory_space<vmem>>, %arg7: memref<128x1xf32, #tpu.memory_space<vmem>>, %arg8: memref<128x1xf32, #tpu.memory_space<vmem>>, %arg9: memref<1x1xf32, #tpu.memory_space<vmem>>, %arg10: memref<1x128xf32, #tpu.memory_space<vmem>>) attributes {dimension_semantics = [#tpu.dimension_semantics<parallel>], iteration_bounds = array<i64: 1>, scalar_prefetch = 0 : i64, scratch_operands = 0 : i64, tpu.core_type = #tpu.core_type<tc>, window_params = [{transform_indices = @transform_0, window_bounds = array<i64: 4, 128>}, {pipeline_mode = #tpu.pipeline_mode<synchronous>, transform_indices = @transform_1, window_bounds = array<i64: 128, 4>}, {pipeline_mode = #tpu.pipeline_mode<synchronous>, transform_indices = @transform_2, window_bounds = array<i64: 128, 1>}, {pipeline_mode = #tpu.pipeline_mode<synchronous>, transform_indices = @transform_3, window_bounds = array<i64: 128, 128>}, {pipeline_mode = #tpu.pipeline_mode<synchronous>, transform_indices = @transform_4, window_bounds = array<i64: 128, 1>}, {pipeline_mode = #tpu.pipeline_mode<synchronous>, transform_indices = @transform_5, window_bounds = array<i64: 128, 128>}, {pipeline_mode = #tpu.pipeline_mode<synchronous>, transform_indices = @transform_6, window_bounds = array<i64: 128, 1>}, {pipeline_mode = #tpu.pipeline_mode<synchronous>, transform_indices = @transform_7, window_bounds = array<i64: 128, 1>}, {pipeline_mode = #tpu.pipeline_mode<synchronous>, transform_indices = @transform_8, window_bounds = array<i64: 1, 1>}, {transform_indices = @transform_9, window_bounds = array<i64: 1, 128>}]} {
    %c0 = arith.constant 0 : index
    %c0_0 = arith.constant 0 : index
    %0 = vector.load %arg1[%c0, %c0_0] : memref<4x128xf32, #tpu.memory_space<vmem>>, vector<4x128xf32>
    %c0_1 = arith.constant 0 : index
    %c0_2 = arith.constant 0 : index
    %1 = vector.load %arg2[%c0_1, %c0_2] : memref<128x4xf32, #tpu.memory_space<vmem>>, vector<128x4xf32>
    %2 = vector.extract_strided_slice %1 {offsets = [0, 0], sizes = [128, 1], strides = [1, 1]} : vector<128x4xf32> to vector<128x1xf32>
    %3 = vector.extract_strided_slice %0 {offsets = [0, 0], sizes = [1, 128], strides = [1, 1]} : vector<4x128xf32> to vector<1x128xf32>
    %4 = vector.broadcast %2 : vector<128x1xf32> to vector<128x128xf32>
    %5 = vector.broadcast %3 : vector<1x128xf32> to vector<128x128xf32>
    %6 = arith.mulf %4, %5 : vector<128x128xf32>
    %7 = vector.extract_strided_slice %1 {offsets = [0, 1], sizes = [128, 1], strides = [1, 1]} : vector<128x4xf32> to vector<128x1xf32>
    %8 = vector.extract_strided_slice %0 {offsets = [1, 0], sizes = [1, 128], strides = [1, 1]} : vector<4x128xf32> to vector<1x128xf32>
    %9 = vector.broadcast %7 : vector<128x1xf32> to vector<128x128xf32>
    %10 = vector.broadcast %8 : vector<1x128xf32> to vector<128x128xf32>
    %11 = arith.mulf %9, %10 : vector<128x128xf32>
    %12 = arith.addf %6, %11 : vector<128x128xf32>
    %13 = vector.extract_strided_slice %1 {offsets = [0, 2], sizes = [128, 1], strides = [1, 1]} : vector<128x4xf32> to vector<128x1xf32>
    %14 = vector.extract_strided_slice %0 {offsets = [2, 0], sizes = [1, 128], strides = [1, 1]} : vector<4x128xf32> to vector<1x128xf32>
    %15 = vector.broadcast %13 : vector<128x1xf32> to vector<128x128xf32>
    %16 = vector.broadcast %14 : vector<1x128xf32> to vector<128x128xf32>
    %17 = arith.mulf %15, %16 : vector<128x128xf32>
    %18 = arith.addf %12, %17 : vector<128x128xf32>
    %19 = vector.extract_strided_slice %1 {offsets = [0, 3], sizes = [128, 1], strides = [1, 1]} : vector<128x4xf32> to vector<128x1xf32>
    %20 = vector.extract_strided_slice %0 {offsets = [3, 0], sizes = [1, 128], strides = [1, 1]} : vector<4x128xf32> to vector<1x128xf32>
    %21 = vector.broadcast %19 : vector<128x1xf32> to vector<128x128xf32>
    %22 = vector.broadcast %20 : vector<1x128xf32> to vector<128x128xf32>
    %23 = arith.mulf %21, %22 : vector<128x128xf32>
    %24 = arith.addf %18, %23 : vector<128x128xf32>
    %c0_3 = arith.constant 0 : index
    %c0_4 = arith.constant 0 : index
    %25 = vector.load %arg3[%c0_3, %c0_4] : memref<128x1xf32, #tpu.memory_space<vmem>>, vector<128x1xf32>
    %26 = vector.broadcast %25 : vector<128x1xf32> to vector<128x128xf32>
    %27 = arith.addf %24, %26 : vector<128x128xf32>
    %cst = arith.constant 0.000000e+00 : f32
    %28 = vector.broadcast %cst : f32 to vector<128x128xf32>
    %29 = arith.maximumf %27, %28 : vector<128x128xf32>
    %c0_5 = arith.constant 0 : index
    %c0_6 = arith.constant 0 : index
    %30 = vector.load %arg4[%c0_5, %c0_6] : memref<128x128xbf16, #tpu.memory_space<vmem>>, vector<128x128xbf16>
    %31 = arith.truncf %29 : vector<128x128xf32> to vector<128x128xbf16>
    %cst_7 = arith.constant dense<0.000000e+00> : vector<128x128xf32>
    %32 = tpu.matmul %30, %31, %cst_7 {dimension_numbers = #tpu.dot_dimension_numbers<[1], [0], [0], [1], [0, 0, 1, 1], [], []>} : vector<128x128xbf16>, vector<128x128xbf16>, vector<128x128xf32> -> vector<128x128xf32>
    %c0_8 = arith.constant 0 : index
    %c0_9 = arith.constant 0 : index
    %33 = vector.load %arg5[%c0_8, %c0_9] : memref<128x1xf32, #tpu.memory_space<vmem>>, vector<128x1xf32>
    %34 = vector.broadcast %33 : vector<128x1xf32> to vector<128x128xf32>
    %35 = arith.addf %32, %34 : vector<128x128xf32>
    %cst_10 = arith.constant 0.000000e+00 : f32
    %36 = vector.broadcast %cst_10 : f32 to vector<128x128xf32>
    %37 = arith.maximumf %35, %36 : vector<128x128xf32>
    %c0_11 = arith.constant 0 : index
    %c0_12 = arith.constant 0 : index
    %38 = vector.load %arg6[%c0_11, %c0_12] : memref<128x128xbf16, #tpu.memory_space<vmem>>, vector<128x128xbf16>
    %39 = arith.truncf %37 : vector<128x128xf32> to vector<128x128xbf16>
    %cst_13 = arith.constant dense<0.000000e+00> : vector<128x128xf32>
    %40 = tpu.matmul %38, %39, %cst_13 {dimension_numbers = #tpu.dot_dimension_numbers<[1], [0], [0], [1], [0, 0, 1, 1], [], []>} : vector<128x128xbf16>, vector<128x128xbf16>, vector<128x128xf32> -> vector<128x128xf32>
    %c0_14 = arith.constant 0 : index
    %c0_15 = arith.constant 0 : index
    %41 = vector.load %arg7[%c0_14, %c0_15] : memref<128x1xf32, #tpu.memory_space<vmem>>, vector<128x1xf32>
    %42 = vector.broadcast %41 : vector<128x1xf32> to vector<128x128xf32>
    %43 = arith.addf %40, %42 : vector<128x128xf32>
    %cst_16 = arith.constant 0.000000e+00 : f32
    %44 = vector.broadcast %cst_16 : f32 to vector<128x128xf32>
    %45 = arith.maximumf %43, %44 : vector<128x128xf32>
    %c0_17 = arith.constant 0 : index
    %c0_18 = arith.constant 0 : index
    %46 = vector.load %arg8[%c0_17, %c0_18] : memref<128x1xf32, #tpu.memory_space<vmem>>, vector<128x1xf32>
    %47 = vector.broadcast %46 : vector<128x1xf32> to vector<128x128xf32>
    %48 = arith.mulf %45, %47 : vector<128x128xf32>
    %cst_19 = arith.constant dense<0.000000e+00> : vector<128xf32>
    %49 = vector.multi_reduction <add>, %48, %cst_19 [0] : vector<128x128xf32> to vector<128xf32>
    %50 = vector.shape_cast %49 : vector<128xf32> to vector<1x128xf32>
    %c0_20 = arith.constant 0 : index
    %c0_21 = arith.constant 0 : index
    %51 = vector.load %arg9[%c0_20, %c0_21] : memref<1x1xf32, #tpu.memory_space<vmem>>, vector<1x1xf32>
    %52 = vector.broadcast %51 : vector<1x1xf32> to vector<1x128xf32>
    %53 = arith.addf %50, %52 : vector<1x128xf32>
    %c0_22 = arith.constant 0 : index
    %c0_23 = arith.constant 0 : index
    %54 = vector.load %arg10[%c0_22, %c0_23] : memref<1x128xf32, #tpu.memory_space<vmem>>, vector<1x128xf32>
    tpu.vector_store %arg10[%c0_22, %c0_23], %53 {strides = array<i32>} : memref<1x128xf32, #tpu.memory_space<vmem>>, vector<1x128xf32>,
    return
  }
  func.func @transform_0(%arg0: i32) -> (i32, i32) {
    %c0_i32 = arith.constant 0 : i32
    %c0_i32_0 = arith.constant 0 : i32
    return %c0_i32, %arg0 : i32, i32
  }
  func.func @transform_1(%arg0: i32) -> (i32, i32) {
    %c0_i32 = arith.constant 0 : i32
    %c0_i32_0 = arith.constant 0 : i32
    %c0_i32_1 = arith.constant 0 : i32
    return %c0_i32, %c0_i32_0 : i32, i32
  }
  func.func @transform_2(%arg0: i32) -> (i32, i32) {
    %c0_i32 = arith.constant 0 : i32
    %c0_i32_0 = arith.constant 0 : i32
    %c0_i32_1 = arith.constant 0 : i32
    return %c0_i32, %c0_i32_0 : i32, i32
  }
  func.func @transform_3(%arg0: i32) -> (i32, i32) {
    %c0_i32 = arith.constant 0 : i32
    %c0_i32_0 = arith.constant 0 : i32
    %c0_i32_1 = arith.constant 0 : i32
    return %c0_i32, %c0_i32_0 : i32, i32
  }
  func.func @transform_4(%arg0: i32) -> (i32, i32) {
    %c0_i32 = arith.constant 0 : i32
    %c0_i32_0 = arith.constant 0 : i32
    %c0_i32_1 = arith.constant 0 : i32
    return %c0_i32, %c0_i32_0 : i32, i32
  }
  func.func @transform_5(%arg0: i32) -> (i32, i32) {
    %c0_i32 = arith.constant 0 : i32
    %c0_i32_0 = arith.constant 0 : i32
    %c0_i32_1 = arith.constant 0 : i32
    return %c0_i32, %c0_i32_0 : i32, i32
  }
  func.func @transform_6(%arg0: i32) -> (i32, i32) {
    %c0_i32 = arith.constant 0 : i32
    %c0_i32_0 = arith.constant 0 : i32
    %c0_i32_1 = arith.constant 0 : i32
    return %c0_i32, %c0_i32_0 : i32, i32
  }
  func.func @transform_7(%arg0: i32) -> (i32, i32) {
    %c0_i32 = arith.constant 0 : i32
    %c0_i32_0 = arith.constant 0 : i32
    %c0_i32_1 = arith.constant 0 : i32
    return %c0_i32, %c0_i32_0 : i32, i32
  }
  func.func @transform_8(%arg0: i32) -> (i32, i32) {
    %c0_i32 = arith.constant 0 : i32
    %c0_i32_0 = arith.constant 0 : i32
    %c0_i32_1 = arith.constant 0 : i32
    return %c0_i32, %c0_i32_0 : i32, i32
  }
  func.func @transform_9(%arg0: i32) -> (i32, i32) {
    %c0_i32 = arith.constant 0 : i32
    %c0_i32_0 = arith.constant 0 : i32
    return %c0_i32, %arg0 : i32, i32
  }
}

</mosaic_0001>

<llo_original>
// kernel: tpu_custom_call.1
$region0: #{tpu_custom_call.1}
  #allocation0 [shape = 'u32[]', space=smem, size = 0x4, offset = 0x4, fixed_abs, tag = 'smem constant byte address 0x4 - core index']
  #allocation1 [shape = 'u32[144,128]{1,0:T(1,128)}', space=vmem, size = 0x12000, scoped, tag = 'internal scratch']
  #allocation2 [shape = 'f32[1,1]{1,0:T(1,128)S(1)}', space=vmem, size = 0x200, scoped, tag = 'scoped memory for tpu_custom_call.1']
  %s0 = inlined_call_operand.vmem [shape: f32[4,128], index: 0, kind: input, shape index: {}]
  %s1 = inlined_call_operand.vmem [shape: f32[128,4], index: 1, kind: input, shape index: {}]
  %s2 = inlined_call_operand.vmem [shape: f32[128,1], index: 2, kind: input, shape index: {}]
  %s3 = inlined_call_operand.vmem [shape: bf16[128,128], index: 3, kind: input, shape index: {}]
  %s4 = inlined_call_operand.vmem [shape: f32[128,1], index: 4, kind: input, shape index: {}]
  %s5 = inlined_call_operand.vmem [shape: bf16[128,128], index: 5, kind: input, shape index: {}]
  %s6 = inlined_call_operand.vmem [shape: f32[128,1], index: 6, kind: input, shape index: {}]
  %s7 = inlined_call_operand.vmem [shape: f32[128,1], index: 7, kind: input, shape index: {}]
  %s8 = inlined_call_operand.<no memory space> [shape: f32[1,1], index: 8, kind: input, shape index: {}]
  %s9 = inlined_call_operand.hbm [shape: f32[1,128], index: 9, kind: output, shape index: {}]
  %s10 = sld [smem:[#allocation0]]
  $region46: #{tpu_custom_call.1} parent=0
    _
  %s12 = ssub.s32 1, %s10
  %s13 = scalar_select 0, %s12, %s10
  %v14 = vstv %s8
  %15 = vst [vmem:[#allocation2] sm:$0x1] %v14
  $region1: #{tpu_custom_call.1} parent=0
    #allocation3 [shape = 'u8[512]{0}', space=vmem, size = 0x400, scoped, tag = 'output window, operand 0, single buffered']
    #allocation4 [shape = 's32[1]{0}', space=sflag, size = 0x4, scoped, tag = 'scoped memory for tpu_custom_call.1']
    %16 = vsyncpa [#allocation4], 0
    // Predicated region
    $region2: #{tpu_custom_call.1} parent=1 // pred_check
      _
    $region3: #{tpu_custom_call.1} parent=1 // pred_check_branch
      %18 = sbr.rel (0) target = $region5
    $region4: #{tpu_custom_call.1} parent=1 // pred_region
      _
    $region5: #{tpu_custom_call.1} parent=1 // pred_fallthru
      _
    // Predicated region
    $region6: #{tpu_custom_call.1} parent=1 // pred_check
      _
    $region7: #{tpu_custom_call.1} parent=1 // pred_check_branch
      %20 = sbr.rel (0) target = $region9
    $region8: #{tpu_custom_call.1} parent=1 // pred_region
      _
    $region9: #{tpu_custom_call.1} parent=1 // pred_fallthru
      _
    // Predicated region
    $region10: #{tpu_custom_call.1} parent=1 // pred_check
      _
    $region11: #{tpu_custom_call.1} parent=1 // pred_check_branch
      %22 = sbr.rel (0) target = $region13
    $region12: #{tpu_custom_call.1} parent=1 // pred_region
      _
    $region13: #{tpu_custom_call.1} parent=1 // pred_fallthru
      _
    // Predicated region
    $region14: #{tpu_custom_call.1} parent=1 // pred_check
      _
    $region15: #{tpu_custom_call.1} parent=1 // pred_check_branch
      %24 = sbr.rel (0) target = $region17
    $region16: #{tpu_custom_call.1} parent=1 // pred_region
      _
    $region17: #{tpu_custom_call.1} parent=1 // pred_fallthru
      _
    // Predicated region
    $region18: #{tpu_custom_call.1} parent=1 // pred_check
      _
    $region19: #{tpu_custom_call.1} parent=1 // pred_check_branch
      %26 = sbr.rel (0) target = $region21
    $region20: #{tpu_custom_call.1} parent=1 // pred_region
      _
    $region21: #{tpu_custom_call.1} parent=1 // pred_fallthru
      _
    // Predicated region
    $region22: #{tpu_custom_call.1} parent=1 // pred_check
      _
    $region23: #{tpu_custom_call.1} parent=1 // pred_check_branch
      %28 = sbr.rel (0) target = $region25
    $region24: #{tpu_custom_call.1} parent=1 // pred_region
      _
    $region25: #{tpu_custom_call.1} parent=1 // pred_fallthru
      _
    // Predicated region
    $region26: #{tpu_custom_call.1} parent=1 // pred_check
      _
    $region27: #{tpu_custom_call.1} parent=1 // pred_check_branch
      %30 = sbr.rel (0) target = $region29
    $region28: #{tpu_custom_call.1} parent=1 // pred_region
      _
    $region29: #{tpu_custom_call.1} parent=1 // pred_fallthru
      _
    // Predicated region
    $region30: #{tpu_custom_call.1} parent=1 // pred_check
      _
    $region31: #{tpu_custom_call.1} parent=1 // pred_check_branch
      %32 = sbr.rel (0) target = $region33
    $region32: #{tpu_custom_call.1} parent=1 // pred_region
      _
    $region33: #{tpu_custom_call.1} parent=1 // pred_fallthru
      _
    // Predicated region
    $region34: #{tpu_custom_call.1} parent=1 // pred_check
      _
    $region35: #{tpu_custom_call.1} parent=1 // pred_check_branch
      %34 = sbr.rel (0) target = $region37
    $region36: #{tpu_custom_call.1} parent=1 // pred_region
      _
    $region37: #{tpu_custom_call.1} parent=1 // pred_fallthru
      _
    %v36 = vld [vmem:[%s0] sm:$0xf]
    %v37 = vld [vmem:[%s1] sm:$0xff]
    %v38 = vld [vmem:[%s1 + $0x8] sm:$0xff]
    %v39 = vld [vmem:[%s1 + $0x10] sm:$0xff]
    %v40 = vld [vmem:[%s1 + $0x18] sm:$0xff]
    %v41 = vld [vmem:[%s1 + $0x20] sm:$0xff]
    %v42 = vld [vmem:[%s1 + $0x28] sm:$0xff]
    %v43 = vld [vmem:[%s1 + $0x30] sm:$0xff]
    %v44 = vld [vmem:[%s1 + $0x38] sm:$0xff]
    %v45 = vld [vmem:[%s1 + $0x40] sm:$0xff]
    %v46 = vld [vmem:[%s1 + $0x48] sm:$0xff]
    %v47 = vld [vmem:[%s1 + $0x50] sm:$0xff]
    %v48 = vld [vmem:[%s1 + $0x58] sm:$0xff]
    %v49 = vld [vmem:[%s1 + $0x60] sm:$0xff]
    %v50 = vld [vmem:[%s1 + $0x68] sm:$0xff]
    %v51 = vld [vmem:[%s1 + $0x70] sm:$0xff]
    %v52 = vld [vmem:[%s1 + $0x78] sm:$0xff]
    %54 = vset.pattern.permute.xlu0 0
    %55 = vperm.xlu0 %54, %v37
    %v56 = vpop.permute.xlu0 %55
    %59 = vset.pattern.permute.xlu0 0
    %60 = vperm.xlu0 %59, %v38
    %v61 = vpop.permute.xlu0 %60
    %64 = vset.pattern.permute.xlu0 0
    %65 = vperm.xlu0 %64, %v39
    %v66 = vpop.permute.xlu0 %65
    %69 = vset.pattern.permute.xlu0 0
    %70 = vperm.xlu0 %69, %v40
    %v71 = vpop.permute.xlu0 %70
    %74 = vset.pattern.permute.xlu0 0
    %75 = vperm.xlu0 %74, %v41
    %v76 = vpop.permute.xlu0 %75
    %79 = vset.pattern.permute.xlu0 0
    %80 = vperm.xlu0 %79, %v42
    %v81 = vpop.permute.xlu0 %80
    %84 = vset.pattern.permute.xlu0 0
    %85 = vperm.xlu0 %84, %v43
    %v86 = vpop.permute.xlu0 %85
    %89 = vset.pattern.permute.xlu0 0
    %90 = vperm.xlu0 %89, %v44
    %v91 = vpop.permute.xlu0 %90
    %94 = vset.pattern.permute.xlu0 0
    %95 = vperm.xlu0 %94, %v45
    %v96 = vpop.permute.xlu0 %95
    %99 = vset.pattern.permute.xlu0 0
    %100 = vperm.xlu0 %99, %v46
    %v101 = vpop.permute.xlu0 %100
    %104 = vset.pattern.permute.xlu0 0
    %105 = vperm.xlu0 %104, %v47
    %v106 = vpop.permute.xlu0 %105
    %109 = vset.pattern.permute.xlu0 0
    %110 = vperm.xlu0 %109, %v48
    %v111 = vpop.permute.xlu0 %110
    %114 = vset.pattern.permute.xlu0 0
    %115 = vperm.xlu0 %114, %v49
    %v116 = vpop.permute.xlu0 %115
    %119 = vset.pattern.permute.xlu0 0
    %120 = vperm.xlu0 %119, %v50
    %v121 = vpop.permute.xlu0 %120
    %124 = vset.pattern.permute.xlu0 0
    %125 = vperm.xlu0 %124, %v51
    %v126 = vpop.permute.xlu0 %125
    %129 = vset.pattern.permute.xlu0 0
    %130 = vperm.xlu0 %129, %v52
    %v131 = vpop.permute.xlu0 %130
    %v133 = vlaneseq
    %v134 = vshrl.u32 %v133, 7
    %v135 = vsub.s32 0, %v134
    %v136 = vrot.slane %v36, %v135
    %v137 = vmul.f32 %v56, %v136
    %v138 = vmul.f32 %v61, %v136
    %v139 = vmul.f32 %v66, %v136
    %v140 = vmul.f32 %v71, %v136
    %v141 = vmul.f32 %v76, %v136
    %v142 = vmul.f32 %v81, %v136
    %v143 = vmul.f32 %v86, %v136
    %v144 = vmul.f32 %v91, %v136
    %v145 = vmul.f32 %v96, %v136
    %v146 = vmul.f32 %v101, %v136
    %v147 = vmul.f32 %v106, %v136
    %v148 = vmul.f32 %v111, %v136
    %v149 = vmul.f32 %v116, %v136
    %v150 = vmul.f32 %v121, %v136
    %v151 = vmul.f32 %v126, %v136
    %v152 = vmul.f32 %v131, %v136
    %153 = vset.pattern.permute.xlu0 1
    %154 = vperm.xlu0 %153, %v37
    %v155 = vpop.permute.xlu0 %154
    %157 = vset.pattern.permute.xlu0 1
    %158 = vperm.xlu0 %157, %v38
    %v159 = vpop.permute.xlu0 %158
    %161 = vset.pattern.permute.xlu0 1
    %162 = vperm.xlu0 %161, %v39
    %v163 = vpop.permute.xlu0 %162
    %165 = vset.pattern.permute.xlu0 1
    %166 = vperm.xlu0 %165, %v40
    %v167 = vpop.permute.xlu0 %166
    %169 = vset.pattern.permute.xlu0 1
    %170 = vperm.xlu0 %169, %v41
    %v171 = vpop.permute.xlu0 %170
    %173 = vset.pattern.permute.xlu0 1
    %174 = vperm.xlu0 %173, %v42
    %v175 = vpop.permute.xlu0 %174
    %177 = vset.pattern.permute.xlu0 1
    %178 = vperm.xlu0 %177, %v43
    %v179 = vpop.permute.xlu0 %178
    %181 = vset.pattern.permute.xlu0 1
    %182 = vperm.xlu0 %181, %v44
    %v183 = vpop.permute.xlu0 %182
    %185 = vset.pattern.permute.xlu0 1
    %186 = vperm.xlu0 %185, %v45
    %v187 = vpop.permute.xlu0 %186
    %189 = vset.pattern.permute.xlu0 1
    %190 = vperm.xlu0 %189, %v46
    %v191 = vpop.permute.xlu0 %190
    %193 = vset.pattern.permute.xlu0 1
    %194 = vperm.xlu0 %193, %v47
    %v195 = vpop.permute.xlu0 %194
    %197 = vset.pattern.permute.xlu0 1
    %198 = vperm.xlu0 %197, %v48
    %v199 = vpop.permute.xlu0 %198
    %201 = vset.pattern.permute.xlu0 1
    %202 = vperm.xlu0 %201, %v49
    %v203 = vpop.permute.xlu0 %202
    %205 = vset.pattern.permute.xlu0 1
    %206 = vperm.xlu0 %205, %v50
    %v207 = vpop.permute.xlu0 %206
    %209 = vset.pattern.permute.xlu0 1
    %210 = vperm.xlu0 %209, %v51
    %v211 = vpop.permute.xlu0 %210
    %213 = vset.pattern.permute.xlu0 1
    %214 = vperm.xlu0 %213, %v52
    %v215 = vpop.permute.xlu0 %214
    %v217 = vlaneseq
    %v218 = vshrl.u32 %v217, 7
    %v219 = vsub.s32 1, %v218
    %v220 = vrot.slane %v36, %v219
    %v221 = vmul.f32 %v155, %v220
    %v222 = vmul.f32 %v159, %v220
    %v223 = vmul.f32 %v163, %v220
    %v224 = vmul.f32 %v167, %v220
    %v225 = vmul.f32 %v171, %v220
    %v226 = vmul.f32 %v175, %v220
    %v227 = vmul.f32 %v179, %v220
    %v228 = vmul.f32 %v183, %v220
    %v229 = vmul.f32 %v187, %v220
    %v230 = vmul.f32 %v191, %v220
    %v231 = vmul.f32 %v195, %v220
    %v232 = vmul.f32 %v199, %v220
    %v233 = vmul.f32 %v203, %v220
    %v234 = vmul.f32 %v207, %v220
    %v235 = vmul.f32 %v211, %v220
    %v236 = vmul.f32 %v215, %v220
    %v237 = vadd.f32 %v137, %v221
    %v238 = vadd.f32 %v138, %v222
    %v239 = vadd.f32 %v139, %v223
    %v240 = vadd.f32 %v140, %v224
    %v241 = vadd.f32 %v141, %v225
    %v242 = vadd.f32 %v142, %v226
    %v243 = vadd.f32 %v143, %v227
    %v244 = vadd.f32 %v144, %v228
    %v245 = vadd.f32 %v145, %v229
    %v246 = vadd.f32 %v146, %v230
    %v247 = vadd.f32 %v147, %v231
    %v248 = vadd.f32 %v148, %v232
    %v249 = vadd.f32 %v149, %v233
    %v250 = vadd.f32 %v150, %v234
    %v251 = vadd.f32 %v151, %v235
    %v252 = vadd.f32 %v152, %v236
    %253 = vset.pattern.permute.xlu0 2
    %254 = vperm.xlu0 %253, %v37
    %v255 = vpop.permute.xlu0 %254
    %257 = vset.pattern.permute.xlu0 2
    %258 = vperm.xlu0 %257, %v38
    %v259 = vpop.permute.xlu0 %258
    %261 = vset.pattern.permute.xlu0 2
    %262 = vperm.xlu0 %261, %v39
    %v263 = vpop.permute.xlu0 %262
    %265 = vset.pattern.permute.xlu0 2
    %266 = vperm.xlu0 %265, %v40
    %v267 = vpop.permute.xlu0 %266
    %269 = vset.pattern.permute.xlu0 2
    %270 = vperm.xlu0 %269, %v41
    %v271 = vpop.permute.xlu0 %270
    %273 = vset.pattern.permute.xlu0 2
    %274 = vperm.xlu0 %273, %v42
    %v275 = vpop.permute.xlu0 %274
    %277 = vset.pattern.permute.xlu0 2
    %278 = vperm.xlu0 %277, %v43
    %v279 = vpop.permute.xlu0 %278
    %281 = vset.pattern.permute.xlu0 2
    %282 = vperm.xlu0 %281, %v44
    %v283 = vpop.permute.xlu0 %282
    %285 = vset.pattern.permute.xlu0 2
    %286 = vperm.xlu0 %285, %v45
    %v287 = vpop.permute.xlu0 %286
    %289 = vset.pattern.permute.xlu0 2
    %290 = vperm.xlu0 %289, %v46
    %v291 = vpop.permute.xlu0 %290
    %293 = vset.pattern.permute.xlu0 2
    %294 = vperm.xlu0 %293, %v47
    %v295 = vpop.permute.xlu0 %294
    %297 = vset.pattern.permute.xlu0 2
    %298 = vperm.xlu0 %297, %v48
    %v299 = vpop.permute.xlu0 %298
    %301 = vset.pattern.permute.xlu0 2
    %302 = vperm.xlu0 %301, %v49
    %v303 = vpop.permute.xlu0 %302
    %305 = vset.pattern.permute.xlu0 2
    %306 = vperm.xlu0 %305, %v50
    %v307 = vpop.permute.xlu0 %306
    %309 = vset.pattern.permute.xlu0 2
    %310 = vperm.xlu0 %309, %v51
    %v311 = vpop.permute.xlu0 %310
    %313 = vset.pattern.permute.xlu0 2
    %314 = vperm.xlu0 %313, %v52
    %v315 = vpop.permute.xlu0 %314
    %v317 = vlaneseq
    %v318 = vshrl.u32 %v317, 7
    %v319 = vsub.s32 2, %v318
    %v320 = vrot.slane %v36, %v319
    %v321 = vmul.f32 %v255, %v320
    %v322 = vmul.f32 %v259, %v320
    %v323 = vmul.f32 %v263, %v320
    %v324 = vmul.f32 %v267, %v320
    %v325 = vmul.f32 %v271, %v320
    %v326 = vmul.f32 %v275, %v320
    %v327 = vmul.f32 %v279, %v320
    %v328 = vmul.f32 %v283, %v320
    %v329 = vmul.f32 %v287, %v320
    %v330 = vmul.f32 %v291, %v320
    %v331 = vmul.f32 %v295, %v320
    %v332 = vmul.f32 %v299, %v320
    %v333 = vmul.f32 %v303, %v320
    %v334 = vmul.f32 %v307, %v320
    %v335 = vmul.f32 %v311, %v320
    %v336 = vmul.f32 %v315, %v320
    %v337 = vadd.f32 %v237, %v321
    %v338 = vadd.f32 %v238, %v322
    %v339 = vadd.f32 %v239, %v323
    %v340 = vadd.f32 %v240, %v324
    %v341 = vadd.f32 %v241, %v325
    %v342 = vadd.f32 %v242, %v326
    %v343 = vadd.f32 %v243, %v327
    %v344 = vadd.f32 %v244, %v328
    %v345 = vadd.f32 %v245, %v329
    %v346 = vadd.f32 %v246, %v330
    %v347 = vadd.f32 %v247, %v331
    %v348 = vadd.f32 %v248, %v332
    %v349 = vadd.f32 %v249, %v333
    %v350 = vadd.f32 %v250, %v334
    %v351 = vadd.f32 %v251, %v335
    %v352 = vadd.f32 %v252, %v336
    %353 = vset.pattern.permute.xlu0 3
    %354 = vperm.xlu0 %353, %v37
    %v355 = vpop.permute.xlu0 %354
    %357 = vset.pattern.permute.xlu0 3
    %358 = vperm.xlu0 %357, %v38
    %v359 = vpop.permute.xlu0 %358
    %361 = vset.pattern.permute.xlu0 3
    %362 = vperm.xlu0 %361, %v39
    %v363 = vpop.permute.xlu0 %362
    %365 = vset.pattern.permute.xlu0 3
    %366 = vperm.xlu0 %365, %v40
    %v367 = vpop.permute.xlu0 %366
    %369 = vset.pattern.permute.xlu0 3
    %370 = vperm.xlu0 %369, %v41
    %v371 = vpop.permute.xlu0 %370
    %373 = vset.pattern.permute.xlu0 3
    %374 = vperm.xlu0 %373, %v42
    %v375 = vpop.permute.xlu0 %374
    %377 = vset.pattern.permute.xlu0 3
    %378 = vperm.xlu0 %377, %v43
    %v379 = vpop.permute.xlu0 %378
    %381 = vset.pattern.permute.xlu0 3
    %382 = vperm.xlu0 %381, %v44
    %v383 = vpop.permute.xlu0 %382
    %385 = vset.pattern.permute.xlu0 3
    %386 = vperm.xlu0 %385, %v45
    %v387 = vpop.permute.xlu0 %386
    %389 = vset.pattern.permute.xlu0 3
    %390 = vperm.xlu0 %389, %v46
    %v391 = vpop.permute.xlu0 %390
    %393 = vset.pattern.permute.xlu0 3
    %394 = vperm.xlu0 %393, %v47
    %v395 = vpop.permute.xlu0 %394
    %397 = vset.pattern.permute.xlu0 3
    %398 = vperm.xlu0 %397, %v48
    %v399 = vpop.permute.xlu0 %398
    %401 = vset.pattern.permute.xlu0 3
    %402 = vperm.xlu0 %401, %v49
    %v403 = vpop.permute.xlu0 %402
    %405 = vset.pattern.permute.xlu0 3
    %406 = vperm.xlu0 %405, %v50
    %v407 = vpop.permute.xlu0 %406
    %409 = vset.pattern.permute.xlu0 3
    %410 = vperm.xlu0 %409, %v51
    %v411 = vpop.permute.xlu0 %410
    %413 = vset.pattern.permute.xlu0 3
    %414 = vperm.xlu0 %413, %v52
    %v415 = vpop.permute.xlu0 %414
    %v417 = vlaneseq
    %v418 = vshrl.u32 %v417, 7
    %v419 = vsub.s32 3, %v418
    %v420 = vrot.slane %v36, %v419
    %v421 = vmul.f32 %v355, %v420
    %v422 = vmul.f32 %v359, %v420
    %v423 = vmul.f32 %v363, %v420
    %v424 = vmul.f32 %v367, %v420
    %v425 = vmul.f32 %v371, %v420
    %v426 = vmul.f32 %v375, %v420
    %v427 = vmul.f32 %v379, %v420
    %v428 = vmul.f32 %v383, %v420
    %v429 = vmul.f32 %v387, %v420
    %v430 = vmul.f32 %v391, %v420
    %v431 = vmul.f32 %v395, %v420
    %v432 = vmul.f32 %v399, %v420
    %v433 = vmul.f32 %v403, %v420
    %v434 = vmul.f32 %v407, %v420
    %v435 = vmul.f32 %v411, %v420
    %v436 = vmul.f32 %v415, %v420
    %v437 = vadd.f32 %v337, %v421
    %v438 = vadd.f32 %v338, %v422
    %v439 = vadd.f32 %v339, %v423
    %v440 = vadd.f32 %v340, %v424
    %v441 = vadd.f32 %v341, %v425
    %v442 = vadd.f32 %v342, %v426
    %v443 = vadd.f32 %v343, %v427
    %v444 = vadd.f32 %v344, %v428
    %v445 = vadd.f32 %v345, %v429
    %v446 = vadd.f32 %v346, %v430
    %v447 = vadd.f32 %v347, %v431
    %v448 = vadd.f32 %v348, %v432
    %v449 = vadd.f32 %v349, %v433
    %v450 = vadd.f32 %v350, %v434
    %v451 = vadd.f32 %v351, %v435
    %v452 = vadd.f32 %v352, %v436
    %v453 = vld [vmem:[%s2] sm:$0xff]
    %v454 = vld [vmem:[%s2 + $0x8] sm:$0xff]
    %v455 = vld [vmem:[%s2 + $0x10] sm:$0xff]
    %v456 = vld [vmem:[%s2 + $0x18] sm:$0xff]
    %v457 = vld [vmem:[%s2 + $0x20] sm:$0xff]
    %v458 = vld [vmem:[%s2 + $0x28] sm:$0xff]
    %v459 = vld [vmem:[%s2 + $0x30] sm:$0xff]
    %v460 = vld [vmem:[%s2 + $0x38] sm:$0xff]
    %v461 = vld [vmem:[%s2 + $0x40] sm:$0xff]
    %v462 = vld [vmem:[%s2 + $0x48] sm:$0xff]
    %v463 = vld [vmem:[%s2 + $0x50] sm:$0xff]
    %v464 = vld [vmem:[%s2 + $0x58] sm:$0xff]
    %v465 = vld [vmem:[%s2 + $0x60] sm:$0xff]
    %v466 = vld [vmem:[%s2 + $0x68] sm:$0xff]
    %v467 = vld [vmem:[%s2 + $0x70] sm:$0xff]
    %v468 = vld [vmem:[%s2 + $0x78] sm:$0xff]
    %470 = vset.pattern.permute.xlu0 0
    %471 = vperm.xlu0 %470, %v453
    %v472 = vpop.permute.xlu0 %471
    %475 = vset.pattern.permute.xlu0 0
    %476 = vperm.xlu0 %475, %v454
    %v477 = vpop.permute.xlu0 %476
    %480 = vset.pattern.permute.xlu0 0
    %481 = vperm.xlu0 %480, %v455
    %v482 = vpop.permute.xlu0 %481
    %485 = vset.pattern.permute.xlu0 0
    %486 = vperm.xlu0 %485, %v456
    %v487 = vpop.permute.xlu0 %486
    %490 = vset.pattern.permute.xlu0 0
    %491 = vperm.xlu0 %490, %v457
    %v492 = vpop.permute.xlu0 %491
    %495 = vset.pattern.permute.xlu0 0
    %496 = vperm.xlu0 %495, %v458
    %v497 = vpop.permute.xlu0 %496
    %500 = vset.pattern.permute.xlu0 0
    %501 = vperm.xlu0 %500, %v459
    %v502 = vpop.permute.xlu0 %501
    %505 = vset.pattern.permute.xlu0 0
    %506 = vperm.xlu0 %505, %v460
    %v507 = vpop.permute.xlu0 %506
    %510 = vset.pattern.permute.xlu0 0
    %511 = vperm.xlu0 %510, %v461
    %v512 = vpop.permute.xlu0 %511
    %515 = vset.pattern.permute.xlu0 0
    %516 = vperm.xlu0 %515, %v462
    %v517 = vpop.permute.xlu0 %516
    %520 = vset.pattern.permute.xlu0 0
    %521 = vperm.xlu0 %520, %v463
    %v522 = vpop.permute.xlu0 %521
    %525 = vset.pattern.permute.xlu0 0
    %526 = vperm.xlu0 %525, %v464
    %v527 = vpop.permute.xlu0 %526
    %530 = vset.pattern.permute.xlu0 0
    %531 = vperm.xlu0 %530, %v465
    %v532 = vpop.permute.xlu0 %531
    %535 = vset.pattern.permute.xlu0 0
    %536 = vperm.xlu0 %535, %v466
    %v537 = vpop.permute.xlu0 %536
    %540 = vset.pattern.permute.xlu0 0
    %541 = vperm.xlu0 %540, %v467
    %v542 = vpop.permute.xlu0 %541
    %545 = vset.pattern.permute.xlu0 0
    %546 = vperm.xlu0 %545, %v468
    %v547 = vpop.permute.xlu0 %546
    %v549 = vadd.f32 %v437, %v472
    %v550 = vadd.f32 %v438, %v477
    %v551 = vadd.f32 %v439, %v482
    %v552 = vadd.f32 %v440, %v487
    %v553 = vadd.f32 %v441, %v492
    %v554 = vadd.f32 %v442, %v497
    %v555 = vadd.f32 %v443, %v502
    %v556 = vadd.f32 %v444, %v507
    %v557 = vadd.f32 %v445, %v512
    %v558 = vadd.f32 %v446, %v517
    %v559 = vadd.f32 %v447, %v522
    %v560 = vadd.f32 %v448, %v527
    %v561 = vadd.f32 %v449, %v532
    %v562 = vadd.f32 %v450, %v537
    %v563 = vadd.f32 %v451, %v542
    %v564 = vadd.f32 %v452, %v547
    %v565 = vmax.f32 %v549, 0.0
    %v566 = vmax.f32 %v550, 0.0
    %v567 = vmax.f32 %v551, 0.0
    %v568 = vmax.f32 %v552, 0.0
    %v569 = vmax.f32 %v553, 0.0
    %v570 = vmax.f32 %v554, 0.0
    %v571 = vmax.f32 %v555, 0.0
    %v572 = vmax.f32 %v556, 0.0
    %v573 = vmax.f32 %v557, 0.0
    %v574 = vmax.f32 %v558, 0.0
    %v575 = vmax.f32 %v559, 0.0
    %v576 = vmax.f32 %v560, 0.0
    %v577 = vmax.f32 %v561, 0.0
    %v578 = vmax.f32 %v562, 0.0
    %v579 = vmax.f32 %v563, 0.0
    %v580 = vmax.f32 %v564, 0.0
    %v581 = vld [vmem:[%s3] sm:$0xf]
    %v582 = vld [vmem:[%s3 + $0x4] sm:$0xf]
    %v583 = vld [vmem:[%s3 + $0x8] sm:$0xf]
    %v584 = vld [vmem:[%s3 + $0xc] sm:$0xf]
    %v585 = vld [vmem:[%s3 + $0x10] sm:$0xf]
    %v586 = vld [vmem:[%s3 + $0x14] sm:$0xf]
    %v587 = vld [vmem:[%s3 + $0x18] sm:$0xf]
    %v588 = vld [vmem:[%s3 + $0x1c] sm:$0xf]
    %v589 = vld [vmem:[%s3 + $0x20] sm:$0xf]
    %v590 = vld [vmem:[%s3 + $0x24] sm:$0xf]
    %v591 = vld [vmem:[%s3 + $0x28] sm:$0xf]
    %v592 = vld [vmem:[%s3 + $0x2c] sm:$0xf]
    %v593 = vld [vmem:[%s3 + $0x30] sm:$0xf]
    %v594 = vld [vmem:[%s3 + $0x34] sm:$0xf]
    %v595 = vld [vmem:[%s3 + $0x38] sm:$0xf]
    %v596 = vld [vmem:[%s3 + $0x3c] sm:$0xf]
    %v597 = vpack.c.bf16 %v566, %v565
    %v598 = vpack.c.bf16 %v568, %v567
    %v599 = vpack.c.bf16 %v570, %v569
    %v600 = vpack.c.bf16 %v572, %v571
    %v601 = vpack.c.bf16 %v574, %v573
    %v602 = vpack.c.bf16 %v576, %v575
    %v603 = vpack.c.bf16 %v578, %v577
    %v604 = vpack.c.bf16 %v580, %v579
    %v605 = vld [vmem:[%s4] sm:$0xff]
    %v606 = vld [vmem:[%s4 + $0x8] sm:$0xff]
    %v607 = vld [vmem:[%s4 + $0x10] sm:$0xff]
    %v608 = vld [vmem:[%s4 + $0x18] sm:$0xff]
    %v609 = vld [vmem:[%s4 + $0x20] sm:$0xff]
    %v610 = vld [vmem:[%s4 + $0x28] sm:$0xff]
    %v611 = vld [vmem:[%s4 + $0x30] sm:$0xff]
    %v612 = vld [vmem:[%s4 + $0x38] sm:$0xff]
    %v613 = vld [vmem:[%s4 + $0x40] sm:$0xff]
    %v614 = vld [vmem:[%s4 + $0x48] sm:$0xff]
    %v615 = vld [vmem:[%s4 + $0x50] sm:$0xff]
    %v616 = vld [vmem:[%s4 + $0x58] sm:$0xff]
    %v617 = vld [vmem:[%s4 + $0x60] sm:$0xff]
    %v618 = vld [vmem:[%s4 + $0x68] sm:$0xff]
    %v619 = vld [vmem:[%s4 + $0x70] sm:$0xff]
    %v620 = vld [vmem:[%s4 + $0x78] sm:$0xff]
    %622 = vset.pattern.permute.xlu0 0
    %623 = vperm.xlu0 %622, %v605
    %v624 = vpop.permute.xlu0 %623
    %627 = vset.pattern.permute.xlu0 0
    %628 = vperm.xlu0 %627, %v606
    %v629 = vpop.permute.xlu0 %628
    %632 = vset.pattern.permute.xlu0 0
    %633 = vperm.xlu0 %632, %v607
    %v634 = vpop.permute.xlu0 %633
    %637 = vset.pattern.permute.xlu0 0
    %638 = vperm.xlu0 %637, %v608
    %v639 = vpop.permute.xlu0 %638
    %642 = vset.pattern.permute.xlu0 0
    %643 = vperm.xlu0 %642, %v609
    %v644 = vpop.permute.xlu0 %643
    %647 = vset.pattern.permute.xlu0 0
    %648 = vperm.xlu0 %647, %v610
    %v649 = vpop.permute.xlu0 %648
    %652 = vset.pattern.permute.xlu0 0
    %653 = vperm.xlu0 %652, %v611
    %v654 = vpop.permute.xlu0 %653
    %657 = vset.pattern.permute.xlu0 0
    %658 = vperm.xlu0 %657, %v612
    %v659 = vpop.permute.xlu0 %658
    %662 = vset.pattern.permute.xlu0 0
    %663 = vperm.xlu0 %662, %v613
    %v664 = vpop.permute.xlu0 %663
    %667 = vset.pattern.permute.xlu0 0
    %668 = vperm.xlu0 %667, %v614
    %v669 = vpop.permute.xlu0 %668
    %672 = vset.pattern.permute.xlu0 0
    %673 = vperm.xlu0 %672, %v615
    %v674 = vpop.permute.xlu0 %673
    %677 = vset.pattern.permute.xlu0 0
    %678 = vperm.xlu0 %677, %v616
    %v679 = vpop.permute.xlu0 %678
    %682 = vset.pattern.permute.xlu0 0
    %683 = vperm.xlu0 %682, %v617
    %v684 = vpop.permute.xlu0 %683
    %687 = vset.pattern.permute.xlu0 0
    %688 = vperm.xlu0 %687, %v618
    %v689 = vpop.permute.xlu0 %688
    %692 = vset.pattern.permute.xlu0 0
    %693 = vperm.xlu0 %692, %v619
    %v694 = vpop.permute.xlu0 %693
    %697 = vset.pattern.permute.xlu0 0
    %698 = vperm.xlu0 %697, %v620
    %v699 = vpop.permute.xlu0 %698
    %v717 = vunpack.c.l.b16 %v581
    %v718 = vunpack.c.l.b16 %v582
    %v719 = vunpack.c.l.b16 %v583
    %v720 = vunpack.c.l.b16 %v584
    %v721 = vunpack.c.l.b16 %v585
    %v722 = vunpack.c.l.b16 %v586
    %v723 = vunpack.c.l.b16 %v587
    %v724 = vunpack.c.l.b16 %v588
    %v725 = vunpack.c.l.b16 %v589
    %v726 = vunpack.c.l.b16 %v590
    %v727 = vunpack.c.l.b16 %v591
    %v728 = vunpack.c.l.b16 %v592
    %v729 = vunpack.c.l.b16 %v593
    %v730 = vunpack.c.l.b16 %v594
    %v731 = vunpack.c.l.b16 %v595
    %v732 = vunpack.c.l.b16 %v596
    %v733 = vpack.c.b16 %v718, %v717
    %v734 = vpack.c.b16 %v720, %v719
    %v735 = vpack.c.b16 %v722, %v721
    %v736 = vpack.c.b16 %v724, %v723
    %v737 = vpack.c.b16 %v726, %v725
    %v738 = vpack.c.b16 %v728, %v727
    %v739 = vpack.c.b16 %v730, %v729
    %v740 = vpack.c.b16 %v732, %v731
    %749 = vmatprep.subr.bf16.mxu0 0
    %750 = vmatpush1.bf16.msra.mxu0 %v597
    %751 = vmatprep.subr.bf16.mxu0 0
    %752 = vmatpush1.bf16.msra.mxu0 %v598
    %753 = vmatprep.subr.bf16.mxu0 0
    %754 = vmatpush1.bf16.msra.mxu0 %v599
    %755 = vmatprep.subr.bf16.mxu0 0
    %756 = vmatpush1.bf16.msra.mxu0 %v600
    %757 = vmatprep.subr.bf16.mxu0 0
    %758 = vmatpush1.bf16.msra.mxu0 %v601
    %759 = vmatprep.subr.bf16.mxu0 0
    %760 = vmatpush1.bf16.msra.mxu0 %v602
    %761 = vmatprep.subr.bf16.mxu0 0
    %762 = vmatpush1.bf16.msra.mxu0 %v603
    %763 = vmatprep.subr.bf16.mxu0 0
    %764 = vmatpush1.bf16.msra.mxu0 %v604
    %765 = vmatprep.subr.bf16.mxu0 0
    %766 = vmatpush1.bf16.msra.mxu0 0
    %767 = vmatprep.subr.bf16.mxu0 0
    %768 = vmatpush1.bf16.msra.mxu0 0
    %769 = vmatprep.subr.bf16.mxu0 0
    %770 = vmatpush1.bf16.msra.mxu0 0
    %771 = vmatprep.subr.bf16.mxu0 0
    %772 = vmatpush1.bf16.msra.mxu0 0
    %773 = vmatprep.subr.bf16.mxu0 0
    %774 = vmatpush1.bf16.msra.mxu0 0
    %775 = vmatprep.subr.bf16.mxu0 0
    %776 = vmatpush1.bf16.msra.mxu0 0
    %777 = vmatprep.subr.bf16.mxu0 0
    %778 = vmatpush1.bf16.msra.mxu0 0
    %779 = vmatprep.subr.bf16.mxu0 0
    %780 = vmatpush1.bf16.msra.mxu0 0
    %781 = vmatprep.mubr.bf16.mxu0 0
    %782 = vmatmul.mubr.bf16.gmra.mrb[0].mxu0 %v733
    %v783 = vpop.f32.mrb[0].mxu0
    %v784 = vadd.f32 %v624, %v783
    %v785 = vpop.f32.mrb[0].mxu0
    %v786 = vpop.f32.mrb[0].mxu0
    %v787 = vadd.f32 %v629, %v786
    %v788 = vpop.f32.mrb[0].mxu0
    %789 = vmatprep.mubr.bf16.mxu0 0
    %790 = vmatmul.mubr.bf16.gmra.mrb[0].mxu0 %v734
    %v791 = vpop.f32.mrb[0].mxu0
    %v792 = vadd.f32 %v634, %v791
    %v793 = vpop.f32.mrb[0].mxu0
    %v794 = vpop.f32.mrb[0].mxu0
    %v795 = vadd.f32 %v639, %v794
    %v796 = vpop.f32.mrb[0].mxu0
    %797 = vmatprep.mubr.bf16.mxu0 0
    %798 = vmatmul.mubr.bf16.gmra.mrb[0].mxu0 %v735
    %v799 = vpop.f32.mrb[0].mxu0
    %v800 = vadd.f32 %v644, %v799
    %v801 = vpop.f32.mrb[0].mxu0
    %v802 = vpop.f32.mrb[0].mxu0
    %v803 = vadd.f32 %v649, %v802
    %v804 = vpop.f32.mrb[0].mxu0
    %805 = vmatprep.mubr.bf16.mxu0 0
    %806 = vmatmul.mubr.bf16.gmra.mrb[0].mxu0 %v736
    %v807 = vpop.f32.mrb[0].mxu0
    %v808 = vadd.f32 %v654, %v807
    %v809 = vpop.f32.mrb[0].mxu0
    %v810 = vpop.f32.mrb[0].mxu0
    %v811 = vadd.f32 %v659, %v810
    %v812 = vpop.f32.mrb[0].mxu0
    %813 = vmatprep.mubr.bf16.mxu0 0
    %814 = vmatmul.mubr.bf16.gmra.mrb[0].mxu0 %v737
    %v815 = vpop.f32.mrb[0].mxu0
    %v816 = vadd.f32 %v664, %v815
    %v817 = vpop.f32.mrb[0].mxu0
    %v818 = vpop.f32.mrb[0].mxu0
    %v819 = vadd.f32 %v669, %v818
    %v820 = vpop.f32.mrb[0].mxu0
    %821 = vmatprep.mubr.bf16.mxu0 0
    %822 = vmatmul.mubr.bf16.gmra.mrb[0].mxu0 %v738
    %v823 = vpop.f32.mrb[0].mxu0
    %v824 = vadd.f32 %v674, %v823
    %v825 = vpop.f32.mrb[0].mxu0
    %v826 = vpop.f32.mrb[0].mxu0
    %v827 = vadd.f32 %v679, %v826
    %v828 = vpop.f32.mrb[0].mxu0
    %829 = vmatprep.mubr.bf16.mxu0 0
    %830 = vmatmul.mubr.bf16.gmra.mrb[0].mxu0 %v739
    %v831 = vpop.f32.mrb[0].mxu0
    %v832 = vadd.f32 %v684, %v831
    %v833 = vpop.f32.mrb[0].mxu0
    %v834 = vpop.f32.mrb[0].mxu0
    %v835 = vadd.f32 %v689, %v834
    %v836 = vpop.f32.mrb[0].mxu0
    %837 = vmatprep.mubr.bf16.mxu0 0
    %838 = vmatmul.mubr.bf16.gmra.mrb[0].mxu0 %v740
    %v839 = vpop.f32.mrb[0].mxu0
    %v840 = vadd.f32 %v694, %v839
    %v841 = vpop.f32.mrb[0].mxu0
    %v842 = vpop.f32.mrb[0].mxu0
    %v843 = vadd.f32 %v699, %v842
    %v844 = vpop.f32.mrb[0].mxu0
    %845 = vdwg.mxu0
    %v846 = vmax.f32 %v784, 0.0
    %v847 = vmax.f32 %v787, 0.0
    %v848 = vmax.f32 %v792, 0.0
    %v849 = vmax.f32 %v795, 0.0
    %v850 = vmax.f32 %v800, 0.0
    %v851 = vmax.f32 %v803, 0.0
    %v852 = vmax.f32 %v808, 0.0
    %v853 = vmax.f32 %v811, 0.0
    %v854 = vmax.f32 %v816, 0.0
    %v855 = vmax.f32 %v819, 0.0
    %v856 = vmax.f32 %v824, 0.0
    %v857 = vmax.f32 %v827, 0.0
    %v858 = vmax.f32 %v832, 0.0
    %v859 = vmax.f32 %v835, 0.0
    %v860 = vmax.f32 %v840, 0.0
    %v861 = vmax.f32 %v843, 0.0
    %v862 = vld [vmem:[%s5] sm:$0xf]
    %v863 = vld [vmem:[%s5 + $0x4] sm:$0xf]
    %v864 = vld [vmem:[%s5 + $0x8] sm:$0xf]
    %v865 = vld [vmem:[%s5 + $0xc] sm:$0xf]
    %v866 = vld [vmem:[%s5 + $0x10] sm:$0xf]
    %v867 = vld [vmem:[%s5 + $0x14] sm:$0xf]
    %v868 = vld [vmem:[%s5 + $0x18] sm:$0xf]
    %v869 = vld [vmem:[%s5 + $0x1c] sm:$0xf]
    %v870 = vld [vmem:[%s5 + $0x20] sm:$0xf]
    %v871 = vld [vmem:[%s5 + $0x24] sm:$0xf]
    %v872 = vld [vmem:[%s5 + $0x28] sm:$0xf]
    %v873 = vld [vmem:[%s5 + $0x2c] sm:$0xf]
    %v874 = vld [vmem:[%s5 + $0x30] sm:$0xf]
    %v875 = vld [vmem:[%s5 + $0x34] sm:$0xf]
    %v876 = vld [vmem:[%s5 + $0x38] sm:$0xf]
    %v877 = vld [vmem:[%s5 + $0x3c] sm:$0xf]
    %v878 = vpack.c.bf16 %v847, %v846
    %v879 = vpack.c.bf16 %v849, %v848
    %v880 = vpack.c.bf16 %v851, %v850
    %v881 = vpack.c.bf16 %v853, %v852
    %v882 = vpack.c.bf16 %v855, %v854
    %v883 = vpack.c.bf16 %v857, %v856
    %v884 = vpack.c.bf16 %v859, %v858
    %v885 = vpack.c.bf16 %v861, %v860
    %v886 = vld [vmem:[%s6] sm:$0xff]
    %v887 = vld [vmem:[%s6 + $0x8] sm:$0xff]
    %v888 = vld [vmem:[%s6 + $0x10] sm:$0xff]
    %v889 = vld [vmem:[%s6 + $0x18] sm:$0xff]
    %v890 = vld [vmem:[%s6 + $0x20] sm:$0xff]
    %v891 = vld [vmem:[%s6 + $0x28] sm:$0xff]
    %v892 = vld [vmem:[%s6 + $0x30] sm:$0xff]
    %v893 = vld [vmem:[%s6 + $0x38] sm:$0xff]
    %v894 = vld [vmem:[%s6 + $0x40] sm:$0xff]
    %v895 = vld [vmem:[%s6 + $0x48] sm:$0xff]
    %v896 = vld [vmem:[%s6 + $0x50] sm:$0xff]
    %v897 = vld [vmem:[%s6 + $0x58] sm:$0xff]
    %v898 = vld [vmem:[%s6 + $0x60] sm:$0xff]
    %v899 = vld [vmem:[%s6 + $0x68] sm:$0xff]
    %v900 = vld [vmem:[%s6 + $0x70] sm:$0xff]
    %v901 = vld [vmem:[%s6 + $0x78] sm:$0xff]
    %903 = vset.pattern.permute.xlu0 0
    %904 = vperm.xlu0 %903, %v886
    %v905 = vpop.permute.xlu0 %904
    %908 = vset.pattern.permute.xlu0 0
    %909 = vperm.xlu0 %908, %v887
    %v910 = vpop.permute.xlu0 %909
    %913 = vset.pattern.permute.xlu0 0
    %914 = vperm.xlu0 %913, %v888
    %v915 = vpop.permute.xlu0 %914
    %918 = vset.pattern.permute.xlu0 0
    %919 = vperm.xlu0 %918, %v889
    %v920 = vpop.permute.xlu0 %919
    %923 = vset.pattern.permute.xlu0 0
    %924 = vperm.xlu0 %923, %v890
    %v925 = vpop.permute.xlu0 %924
    %928 = vset.pattern.permute.xlu0 0
    %929 = vperm.xlu0 %928, %v891
    %v930 = vpop.permute.xlu0 %929
    %933 = vset.pattern.permute.xlu0 0
    %934 = vperm.xlu0 %933, %v892
    %v935 = vpop.permute.xlu0 %934
    %938 = vset.pattern.permute.xlu0 0
    %939 = vperm.xlu0 %938, %v893
    %v940 = vpop.permute.xlu0 %939
    %943 = vset.pattern.permute.xlu0 0
    %944 = vperm.xlu0 %943, %v894
    %v945 = vpop.permute.xlu0 %944
    %948 = vset.pattern.permute.xlu0 0
    %949 = vperm.xlu0 %948, %v895
    %v950 = vpop.permute.xlu0 %949
    %953 = vset.pattern.permute.xlu0 0
    %954 = vperm.xlu0 %953, %v896
    %v955 = vpop.permute.xlu0 %954
    %958 = vset.pattern.permute.xlu0 0
    %959 = vperm.xlu0 %958, %v897
    %v960 = vpop.permute.xlu0 %959
    %963 = vset.pattern.permute.xlu0 0
    %964 = vperm.xlu0 %963, %v898
    %v965 = vpop.permute.xlu0 %964
    %968 = vset.pattern.permute.xlu0 0
    %969 = vperm.xlu0 %968, %v899
    %v970 = vpop.permute.xlu0 %969
    %973 = vset.pattern.permute.xlu0 0
    %974 = vperm.xlu0 %973, %v900
    %v975 = vpop.permute.xlu0 %974
    %978 = vset.pattern.permute.xlu0 0
    %979 = vperm.xlu0 %978, %v901
    %v980 = vpop.permute.xlu0 %979
    %v998 = vunpack.c.l.b16 %v862
    %v999 = vunpack.c.l.b16 %v863
    %v1000 = vunpack.c.l.b16 %v864
    %v1001 = vunpack.c.l.b16 %v865
    %v1002 = vunpack.c.l.b16 %v866
    %v1003 = vunpack.c.l.b16 %v867
    %v1004 = vunpack.c.l.b16 %v868
    %v1005 = vunpack.c.l.b16 %v869
    %v1006 = vunpack.c.l.b16 %v870
    %v1007 = vunpack.c.l.b16 %v871
    %v1008 = vunpack.c.l.b16 %v872
    %v1009 = vunpack.c.l.b16 %v873
    %v1010 = vunpack.c.l.b16 %v874
    %v1011 = vunpack.c.l.b16 %v875
    %v1012 = vunpack.c.l.b16 %v876
    %v1013 = vunpack.c.l.b16 %v877
    %v1014 = vpack.c.b16 %v999, %v998
    %v1015 = vpack.c.b16 %v1001, %v1000
    %v1016 = vpack.c.b16 %v1003, %v1002
    %v1017 = vpack.c.b16 %v1005, %v1004
    %v1018 = vpack.c.b16 %v1007, %v1006
    %v1019 = vpack.c.b16 %v1009, %v1008
    %v1020 = vpack.c.b16 %v1011, %v1010
    %v1021 = vpack.c.b16 %v1013, %v1012
    %1030 = vmatprep.subr.bf16.mxu0 0
    %1031 = vmatpush1.bf16.msra.mxu0 %v878
    %1032 = vmatprep.subr.bf16.mxu0 0
    %1033 = vmatpush1.bf16.msra.mxu0 %v879
    %1034 = vmatprep.subr.bf16.mxu0 0
    %1035 = vmatpush1.bf16.msra.mxu0 %v880
    %1036 = vmatprep.subr.bf16.mxu0 0
    %1037 = vmatpush1.bf16.msra.mxu0 %v881
    %1038 = vmatprep.subr.bf16.mxu0 0
    %1039 = vmatpush1.bf16.msra.mxu0 %v882
    %1040 = vmatprep.subr.bf16.mxu0 0
    %1041 = vmatpush1.bf16.msra.mxu0 %v883
    %1042 = vmatprep.subr.bf16.mxu0 0
    %1043 = vmatpush1.bf16.msra.mxu0 %v884
    %1044 = vmatprep.subr.bf16.mxu0 0
    %1045 = vmatpush1.bf16.msra.mxu0 %v885
    %1046 = vmatprep.subr.bf16.mxu0 0
    %1047 = vmatpush1.bf16.msra.mxu0 0
    %1048 = vmatprep.subr.bf16.mxu0 0
    %1049 = vmatpush1.bf16.msra.mxu0 0
    %1050 = vmatprep.subr.bf16.mxu0 0
    %1051 = vmatpush1.bf16.msra.mxu0 0
    %1052 = vmatprep.subr.bf16.mxu0 0
    %1053 = vmatpush1.bf16.msra.mxu0 0
    %1054 = vmatprep.subr.bf16.mxu0 0
    %1055 = vmatpush1.bf16.msra.mxu0 0
    %1056 = vmatprep.subr.bf16.mxu0 0
    %1057 = vmatpush1.bf16.msra.mxu0 0
    %1058 = vmatprep.subr.bf16.mxu0 0
    %1059 = vmatpush1.bf16.msra.mxu0 0
    %1060 = vmatprep.subr.bf16.mxu0 0
    %1061 = vmatpush1.bf16.msra.mxu0 0
    %1062 = vmatprep.mubr.bf16.mxu0 0
    %1063 = vmatmul.mubr.bf16.gmra.mrb[0].mxu0 %v1014
    %v1064 = vpop.f32.mrb[0].mxu0
    %v1065 = vadd.f32 %v905, %v1064
    %v1066 = vpop.f32.mrb[0].mxu0
    %v1067 = vpop.f32.mrb[0].mxu0
    %v1068 = vadd.f32 %v910, %v1067
    %v1069 = vpop.f32.mrb[0].mxu0
    %1070 = vmatprep.mubr.bf16.mxu0 0
    %1071 = vmatmul.mubr.bf16.gmra.mrb[0].mxu0 %v1015
    %v1072 = vpop.f32.mrb[0].mxu0
    %v1073 = vadd.f32 %v915, %v1072
    %v1074 = vpop.f32.mrb[0].mxu0
    %v1075 = vpop.f32.mrb[0].mxu0
    %v1076 = vadd.f32 %v920, %v1075
    %v1077 = vpop.f32.mrb[0].mxu0
    %1078 = vmatprep.mubr.bf16.mxu0 0
    %1079 = vmatmul.mubr.bf16.gmra.mrb[0].mxu0 %v1016
    %v1080 = vpop.f32.mrb[0].mxu0
    %v1081 = vadd.f32 %v925, %v1080
    %v1082 = vpop.f32.mrb[0].mxu0
    %v1083 = vpop.f32.mrb[0].mxu0
    %v1084 = vadd.f32 %v930, %v1083
    %v1085 = vpop.f32.mrb[0].mxu0
    %1086 = vmatprep.mubr.bf16.mxu0 0
    %1087 = vmatmul.mubr.bf16.gmra.mrb[0].mxu0 %v1017
    %v1088 = vpop.f32.mrb[0].mxu0
    %v1089 = vadd.f32 %v935, %v1088
    %v1090 = vpop.f32.mrb[0].mxu0
    %v1091 = vpop.f32.mrb[0].mxu0
    %v1092 = vadd.f32 %v940, %v1091
    %v1093 = vpop.f32.mrb[0].mxu0
    %1094 = vmatprep.mubr.bf16.mxu0 0
    %1095 = vmatmul.mubr.bf16.gmra.mrb[0].mxu0 %v1018
    %v1096 = vpop.f32.mrb[0].mxu0
    %v1097 = vadd.f32 %v945, %v1096
    %v1098 = vpop.f32.mrb[0].mxu0
    %v1099 = vpop.f32.mrb[0].mxu0
    %v1100 = vadd.f32 %v950, %v1099
    %v1101 = vpop.f32.mrb[0].mxu0
    %1102 = vmatprep.mubr.bf16.mxu0 0
    %1103 = vmatmul.mubr.bf16.gmra.mrb[0].mxu0 %v1019
    %v1104 = vpop.f32.mrb[0].mxu0
    %v1105 = vadd.f32 %v955, %v1104
    %v1106 = vpop.f32.mrb[0].mxu0
    %v1107 = vpop.f32.mrb[0].mxu0
    %v1108 = vadd.f32 %v960, %v1107
    %v1109 = vpop.f32.mrb[0].mxu0
    %1110 = vmatprep.mubr.bf16.mxu0 0
    %1111 = vmatmul.mubr.bf16.gmra.mrb[0].mxu0 %v1020
    %v1112 = vpop.f32.mrb[0].mxu0
    %v1113 = vadd.f32 %v965, %v1112
    %v1114 = vpop.f32.mrb[0].mxu0
    %v1115 = vpop.f32.mrb[0].mxu0
    %v1116 = vadd.f32 %v970, %v1115
    %v1117 = vpop.f32.mrb[0].mxu0
    %1118 = vmatprep.mubr.bf16.mxu0 0
    %1119 = vmatmul.mubr.bf16.gmra.mrb[0].mxu0 %v1021
    %v1120 = vpop.f32.mrb[0].mxu0
    %v1121 = vadd.f32 %v975, %v1120
    %v1122 = vpop.f32.mrb[0].mxu0
    %v1123 = vpop.f32.mrb[0].mxu0
    %v1124 = vadd.f32 %v980, %v1123
    %v1125 = vpop.f32.mrb[0].mxu0
    %1126 = vdwg.mxu0
    %v1127 = vmax.f32 %v1065, 0.0
    %v1128 = vmax.f32 %v1068, 0.0
    %v1129 = vmax.f32 %v1073, 0.0
    %v1130 = vmax.f32 %v1076, 0.0
    %v1131 = vmax.f32 %v1081, 0.0
    %v1132 = vmax.f32 %v1084, 0.0
    %v1133 = vmax.f32 %v1089, 0.0
    %v1134 = vmax.f32 %v1092, 0.0
    %v1135 = vmax.f32 %v1097, 0.0
    %v1136 = vmax.f32 %v1100, 0.0
    %v1137 = vmax.f32 %v1105, 0.0
    %v1138 = vmax.f32 %v1108, 0.0
    %v1139 = vmax.f32 %v1113, 0.0
    %v1140 = vmax.f32 %v1116, 0.0
    %v1141 = vmax.f32 %v1121, 0.0
    %v1142 = vmax.f32 %v1124, 0.0
    %v1143 = vld [vmem:[%s7] sm:$0xff]
    %v1144 = vld [vmem:[%s7 + $0x8] sm:$0xff]
    %v1145 = vld [vmem:[%s7 + $0x10] sm:$0xff]
    %v1146 = vld [vmem:[%s7 + $0x18] sm:$0xff]
    %v1147 = vld [vmem:[%s7 + $0x20] sm:$0xff]
    %v1148 = vld [vmem:[%s7 + $0x28] sm:$0xff]
    %v1149 = vld [vmem:[%s7 + $0x30] sm:$0xff]
    %v1150 = vld [vmem:[%s7 + $0x38] sm:$0xff]
    %v1151 = vld [vmem:[%s7 + $0x40] sm:$0xff]
    %v1152 = vld [vmem:[%s7 + $0x48] sm:$0xff]
    %v1153 = vld [vmem:[%s7 + $0x50] sm:$0xff]
    %v1154 = vld [vmem:[%s7 + $0x58] sm:$0xff]
    %v1155 = vld [vmem:[%s7 + $0x60] sm:$0xff]
    %v1156 = vld [vmem:[%s7 + $0x68] sm:$0xff]
    %v1157 = vld [vmem:[%s7 + $0x70] sm:$0xff]
    %v1158 = vld [vmem:[%s7 + $0x78] sm:$0xff]
    %1160 = vset.pattern.permute.xlu0 0
    %1161 = vperm.xlu0 %1160, %v1143
    %v1162 = vpop.permute.xlu0 %1161
    %1165 = vset.pattern.permute.xlu0 0
    %1166 = vperm.xlu0 %1165, %v1144
    %v1167 = vpop.permute.xlu0 %1166
    %1170 = vset.pattern.permute.xlu0 0
    %1171 = vperm.xlu0 %1170, %v1145
    %v1172 = vpop.permute.xlu0 %1171
    %1175 = vset.pattern.permute.xlu0 0
    %1176 = vperm.xlu0 %1175, %v1146
    %v1177 = vpop.permute.xlu0 %1176
    %1180 = vset.pattern.permute.xlu0 0
    %1181 = vperm.xlu0 %1180, %v1147
    %v1182 = vpop.permute.xlu0 %1181
    %1185 = vset.pattern.permute.xlu0 0
    %1186 = vperm.xlu0 %1185, %v1148
    %v1187 = vpop.permute.xlu0 %1186
    %1190 = vset.pattern.permute.xlu0 0
    %1191 = vperm.xlu0 %1190, %v1149
    %v1192 = vpop.permute.xlu0 %1191
    %1195 = vset.pattern.permute.xlu0 0
    %1196 = vperm.xlu0 %1195, %v1150
    %v1197 = vpop.permute.xlu0 %1196
    %1200 = vset.pattern.permute.xlu0 0
    %1201 = vperm.xlu0 %1200, %v1151
    %v1202 = vpop.permute.xlu0 %1201
    %1205 = vset.pattern.permute.xlu0 0
    %1206 = vperm.xlu0 %1205, %v1152
    %v1207 = vpop.permute.xlu0 %1206
    %1210 = vset.pattern.permute.xlu0 0
    %1211 = vperm.xlu0 %1210, %v1153
    %v1212 = vpop.permute.xlu0 %1211
    %1215 = vset.pattern.permute.xlu0 0
    %1216 = vperm.xlu0 %1215, %v1154
    %v1217 = vpop.permute.xlu0 %1216
    %1220 = vset.pattern.permute.xlu0 0
    %1221 = vperm.xlu0 %1220, %v1155
    %v1222 = vpop.permute.xlu0 %1221
    %1225 = vset.pattern.permute.xlu0 0
    %1226 = vperm.xlu0 %1225, %v1156
    %v1227 = vpop.permute.xlu0 %1226
    %1230 = vset.pattern.permute.xlu0 0
    %1231 = vperm.xlu0 %1230, %v1157
    %v1232 = vpop.permute.xlu0 %1231
    %1235 = vset.pattern.permute.xlu0 0
    %1236 = vperm.xlu0 %1235, %v1158
    %v1237 = vpop.permute.xlu0 %1236
    %v1239 = vmul.f32 %v1127, %v1162
    %v1240 = vmul.f32 %v1128, %v1167
    %v1241 = vmul.f32 %v1129, %v1172
    %v1242 = vmul.f32 %v1130, %v1177
    %v1243 = vmul.f32 %v1131, %v1182
    %v1244 = vmul.f32 %v1132, %v1187
    %v1245 = vmul.f32 %v1133, %v1192
    %v1246 = vmul.f32 %v1134, %v1197
    %v1247 = vmul.f32 %v1135, %v1202
    %v1248 = vmul.f32 %v1136, %v1207
    %v1249 = vmul.f32 %v1137, %v1212
    %v1250 = vmul.f32 %v1138, %v1217
    %v1251 = vmul.f32 %v1139, %v1222
    %v1252 = vmul.f32 %v1140, %v1227
    %v1253 = vmul.f32 %v1141, %v1232
    %v1254 = vmul.f32 %v1142, %v1237
    %v1255 = vadd.f32 %v1239, %v1240
    %v1256 = vadd.f32 %v1255, %v1241
    %v1257 = vadd.f32 %v1256, %v1242
    %v1258 = vadd.f32 %v1257, %v1243
    %v1259 = vadd.f32 %v1258, %v1244
    %v1260 = vadd.f32 %v1259, %v1245
    %v1261 = vadd.f32 %v1260, %v1246
    %v1262 = vadd.f32 %v1261, %v1247
    %v1263 = vadd.f32 %v1262, %v1248
    %v1264 = vadd.f32 %v1263, %v1249
    %v1265 = vadd.f32 %v1264, %v1250
    %v1266 = vadd.f32 %v1265, %v1251
    %v1267 = vadd.f32 %v1266, %v1252
    %v1268 = vadd.f32 %v1267, %v1253
    %v1269 = vadd.f32 %v1268, %v1254
    %v1270 = vrot.slane %v1269, 4
    %v1271 = vadd.f32 %v1269, %v1270
    %v1272 = vrot.slane %v1271, 2
    %v1273 = vadd.f32 %v1271, %v1272
    %v1274 = vrot.slane %v1273, 1
    %v1275 = vadd.f32 %v1273, %v1274
    %v1276 = vld [vmem:[#allocation2] sm:$0x1]
    %1278 = vset.pattern.permute.xlu0 0
    %1279 = vperm.xlu0 %1278, %v1276
    %v1280 = vpop.permute.xlu0 %1279
    %v1282 = vlaneseq
    %v1283 = vshrl.u32 %v1282, 7
    %v1284 = vsub.s32 0, %v1283
    %v1285 = vrot.slane %v1280, %v1284
    %v1286 = vadd.f32 %v1275, %v1285
    %1287 = vst [vmem:[#allocation3] sm:$0x1] %v1286
    // Predicated region
    $region38: #{tpu_custom_call.1} parent=1 // pred_check
      _
    $region39: #{tpu_custom_call.1} parent=1 // pred_check_branch
      %1289 = sbr.rel (0) target = $region41
    $region40: #{tpu_custom_call.1} parent=1 // pred_region
      %s1291 = ssub.s32 16, 16
      %1292 = vsyncadd [#allocation4], %s1291
      %s1294 = sshll.u32 [#allocation3], 4
      %s1295 = int_to_ptr.vmem [resolvable:$true] %s1294
      %1297 = dma.vmem_to_hbm [thread:$0]  %s1295, 16, %s9, [#allocation4]
    $region41: #{tpu_custom_call.1} parent=1 // pred_fallthru
      _
    // Predicated region
    $region42: #{tpu_custom_call.1} parent=1 // pred_check
      _
    $region43: #{tpu_custom_call.1} parent=1 // pred_check_branch
      %1299 = sbr.rel (0) target = $region45
    $region44: #{tpu_custom_call.1} parent=1 // pred_region
      %1300 = dma.done [#allocation4], 16
    $region45: #{tpu_custom_call.1} parent=1 // pred_fallthru
      _
    %1301 = vsyncpa [#allocation4], 1

</llo_original>
